<compile_context>
chip_gen: v6e
topology: v6e:2x2x1
jax: 0.10.0
libtpu: 0.0.40
codegen_flags: <defaults>
</compile_context>

<pallas_src>
import functools

import jax
import jax.numpy as jnp
import numpy as np
from jax.experimental import pallas as pl
from jax.experimental.pallas import tpu as pltpu


# ----------------------------- Pallas kernel -------------------------------
def double_branch_kernel(p_ref, wconv_ref, bconv_ref, wfc_ref, bfc_ref,
                         out_ref, acc_ref, *, inv_hw):
    r = pl.program_id(1)

    @pl.when(r == 0)
    def _init():
        acc_ref[...] = jnp.zeros_like(acc_ref)

    # Fused conv for both branches via block-diagonal weight: one MXU matmul
    # (bf16 inputs, f32 accumulation), bias + ReLU on the VPU.
    conv = jnp.dot(p_ref[...], wconv_ref[...],
                   preferred_element_type=jnp.float32)        # (TILE_R, F1+F2)
    conv = jnp.maximum(conv + bconv_ref[...], 0.0)

    # Global-average-pool contribution of this row tile: XLU sublane reduction
    # accumulated into VMEM scratch (replaces the old kron pooling matmul).
    acc_ref[...] += jnp.sum(conv, axis=0, keepdims=True)      # (1, F1+F2)

    # Finalize once per batch element: mean, fused Linear (+ bias added once).
    @pl.when(r == pl.num_programs(1) - 1)
    def _finalize():
        feat = acc_ref[...] * inv_hw                          # (1, F1+F2)
        row = (jnp.dot(feat, wfc_ref[...],
                       preferred_element_type=jnp.float32)
               + bfc_ref[...])                                # (1, O_pad)
        out_ref[...] = jnp.broadcast_to(
            row[:, None, :], out_ref.shape).astype(out_ref.dtype)


# ------------------------------ JAX wrapper ---------------------------------
def _im2col_3x3_same(x_nhwc):
    """3x3, stride 1, padding 1 im2col.  (B,H,W,C) -> (B*H*W, 9*C)."""
    B, H, W, C = x_nhwc.shape
    xp = jnp.pad(x_nhwc, ((0, 0), (1, 1), (1, 1), (0, 0)))
    cols = [xp[:, ky:ky + H, kx:kx + W, :] for ky in range(3) for kx in range(3)]
    patches = jnp.concatenate(cols, axis=-1)     # tap-major, channel-minor
    return patches.reshape(B * H * W, 9 * C)


def double_branch_forward(x1_nchw, x2_nchw, params, *, tile_r=None):
    """Full DoubleBranchCNN forward through a single row-tiled Pallas kernel."""
    wc1, bc1, wc2, bc2, wfc, bfc = (params["wc1"], params["bc1"], params["wc2"],
                                    params["bc2"], params["wfc"], params["bfc"])
    B, C1, H, W = x1_nchw.shape
    _, C2, _, _ = x2_nchw.shape
    F1, F2 = wc1.shape[-1], wc2.shape[-1]
    O = wfc.shape[-1]
    HW = H * W
    K1, K2 = 9 * C1, 9 * C2
    Ktot, Ftot = K1 + K2, F1 + F2
    O_pad = ((O + 127) // 128) * 128             # lane-dense output store

    # ---- glue (layout only): NCHW->NHWC, im2col, branch fusion, padding ----
    # TODO(synk): build the 3x3 patches inside the kernel from NHWC tiles to
    # avoid the 9x HBM read blowup (matters most on bandwidth-limited v5e).
    x1 = jnp.transpose(x1_nchw, (0, 2, 3, 1))
    x2 = jnp.transpose(x2_nchw, (0, 2, 3, 1))
    p = jnp.concatenate([_im2col_3x3_same(x1), _im2col_3x3_same(x2)], axis=1)
    p = p.astype(jnp.bfloat16)                   # (B*H*W, Ktot), bf16 MXU feed

    w1 = wc1.reshape(K1, F1)
    w2 = wc2.reshape(K2, F2)
    wbd = jnp.concatenate(
        [jnp.concatenate([w1, jnp.zeros((K1, F2), w1.dtype)], axis=1),
         jnp.concatenate([jnp.zeros((K2, F1), w2.dtype), w2], axis=1)],
        axis=0).astype(jnp.bfloat16)             # block-diag (Ktot, Ftot)
    bconv = jnp.concatenate([bc1, bc2]).reshape(1, Ftot).astype(jnp.float32)

    wfc_pad = jnp.zeros((Ftot, O_pad), jnp.float32).at[:, :O].set(wfc)
    bfc_pad = jnp.zeros((1, O_pad), jnp.float32).at[0, :O].set(bfc)

    # Row tiling over H*W positions of one batch element per grid step.
    # At production sizes bump tile_r toward 512-1024, sized against VMEM
    # (v7x has 64 MiB; raise vmem_limit_bytes only with headroom).
    if tile_r is None:
        tile_r = 128 if HW % 128 == 0 else HW
    assert HW % tile_r == 0 and tile_r % 8 == 0
    num_r = HW // tile_r

    grid_spec = pltpu.PrefetchScalarGridSpec(
        num_scalar_prefetch=0,
        grid=(B, num_r),
        in_specs=[
            pl.BlockSpec((tile_r, Ktot), lambda b, r: (b * num_r + r, 0)),
            pl.BlockSpec((Ktot, Ftot), lambda b, r: (0, 0)),
            pl.BlockSpec((1, Ftot), lambda b, r: (0, 0)),
            pl.BlockSpec((Ftot, O_pad), lambda b, r: (0, 0)),
            pl.BlockSpec((1, O_pad), lambda b, r: (0, 0)),
        ],
        out_specs=pl.BlockSpec((1, 8, O_pad), lambda b, r: (b, 0, 0)),
        scratch_shapes=[pltpu.VMEM((1, Ftot), jnp.float32)],
    )

    out_padded = pl.pallas_call(
        functools.partial(double_branch_kernel, inv_hw=1.0 / HW),
        out_shape=jax.ShapeDtypeStruct((B, 8, O_pad), jnp.float32),
        grid_spec=grid_spec,
        compiler_params=pltpu.CompilerParams(
            dimension_semantics=("parallel", "arbitrary")),
    )(p, wbd, bconv, wfc_pad, bfc_pad)

    return out_padded[:, 0, :O]                  # strip sublane/lane padding


# ------------------------- pure-JAX reference -------------------------------
def _branch_ref(x_nhwc, w_hwio, b):
    y = jax.lax.conv_general_dilated(
        x_nhwc, w_hwio, window_strides=(1, 1), padding="SAME",
        dimension_numbers=("NHWC", "HWIO", "NHWC"))
    y = jax.nn.relu(y + b)
    return y.mean(axis=(1, 2))                   # (B, F)


def reference_forward(x1_nchw, x2_nchw, params):
    x1 = jnp.transpose(x1_nchw, (0, 2, 3, 1))
    x2 = jnp.transpose(x2_nchw, (0, 2, 3, 1))
    f1 = _branch_ref(x1, params["wc1"], params["bc1"])
    f2 = _branch_ref(x2, params["wc2"], params["bc2"])
    x = jnp.concatenate([f1, f2], axis=1)        # cat(dim=1)
    return x @ params["wfc"] + params["bfc"]     # fused Linear


# --------------------------------- main --------------------------------------
if __name__ == "__main__":
    B, C1, C2, H, W = 2, 4, 4, 16, 16
    F1, F2, OUT = 32, 32, 8                      # ms/nl feature dims, output_features

    key = jax.random.PRNGKey(0)
    k = jax.random.split(key, 8)
    params = {
        "wc1": jax.random.normal(k[0], (3, 3, C1, F1), jnp.float32) * 0.1,   # HWIO
        "bc1": jax.random.normal(k[1], (F1,), jnp.float32) * 0.1,
        "wc2": jax.random.normal(k[2], (3, 3, C2, F2), jnp.float32) * 0.1,
        "bc2": jax.random.normal(k[3], (F2,), jnp.float32) * 0.1,
        "wfc": jax.random.normal(k[4], (F1 + F2, OUT), jnp.float32) * 0.1,   # Linear (in, out)
        "bfc": jax.random.normal(k[5], (OUT,), jnp.float32) * 0.1,
    }
    x1 = jax.random.normal(k[6], (B, C1, H, W), jnp.float32)   # NCHW (PyTorch convention)
    x2 = jax.random.normal(k[7], (B, C2, H, W), jnp.float32)

    out = jax.block_until_ready(double_branch_forward(x1, x2, params))
    ref = jax.block_until_ready(reference_forward(x1, x2, params))

    # Tolerance deliberately loosened (bf16 MXU inputs, f32 accumulation).
    np.testing.assert_allclose(np.asarray(out), np.asarray(ref), rtol=2e-2, atol=2e-2)
    assert out.shape == (B, OUT) and out.dtype == jnp.float32
    print("KERNEL_OK")
</pallas_src>

<mosaic_0001>
module attributes {stable_mosaic.version = 11 : i64} {
  func.func @double_branch_kernel(%arg0: i32, %arg1: i32, %arg2: memref<128x72xbf16, #tpu.memory_space<vmem>>, %arg3: memref<72x64xbf16, #tpu.memory_space<vmem>>, %arg4: memref<1x64xf32, #tpu.memory_space<vmem>>, %arg5: memref<64x128xf32, #tpu.memory_space<vmem>>, %arg6: memref<1x128xf32, #tpu.memory_space<vmem>>, %arg7: memref<1x8x128xf32, #tpu.memory_space<vmem>>, %arg8: memref<1x64xf32, #tpu.memory_space<vmem>>) attributes {dimension_semantics = [#tpu.dimension_semantics<parallel>, #tpu.dimension_semantics<arbitrary>], iteration_bounds = array<i64: 2, 2>, scalar_prefetch = 0 : i64, scratch_operands = 1 : i64, tpu.core_type = #tpu.core_type<tc>, window_params = [{transform_indices = @transform_0, window_bounds = array<i64: 128, 72>}, {pipeline_mode = #tpu.pipeline_mode<synchronous>, transform_indices = @transform_1, window_bounds = array<i64: 72, 64>}, {pipeline_mode = #tpu.pipeline_mode<synchronous>, transform_indices = @transform_2, window_bounds = array<i64: 1, 64>}, {pipeline_mode = #tpu.pipeline_mode<synchronous>, transform_indices = @transform_3, window_bounds = array<i64: 64, 128>}, {pipeline_mode = #tpu.pipeline_mode<synchronous>, transform_indices = @transform_4, window_bounds = array<i64: 1, 128>}, {transform_indices = @transform_5, window_bounds = array<i64: 1, 8, 128>}]} {
    %c0_i32 = arith.constant 0 : i32
    %0 = arith.cmpi eq, %arg1, %c0_i32 : i32
    %1 = arith.extui %0 : i1 to i32
    %c0_i32_0 = arith.constant 0 : i32
    %2 = arith.cmpi ne, %1, %c0_i32_0 : i32
    scf.if %2 {
      %cst_13 = arith.constant 0.000000e+00 : f32
      %19 = vector.broadcast %cst_13 : f32 to vector<1x64xf32>
      %c0_14 = arith.constant 0 : index
      %c0_15 = arith.constant 0 : index
      %20 = vector.load %arg8[%c0_14, %c0_15] : memref<1x64xf32, #tpu.memory_space<vmem>>, vector<1x64xf32>
      tpu.vector_store %arg8[%c0_14, %c0_15], %19 {strides = array<i32>} : memref<1x64xf32, #tpu.memory_space<vmem>>, vector<1x64xf32>,
    } else {
    }
    %c0 = arith.constant 0 : index
    %c0_1 = arith.constant 0 : index
    %3 = vector.load %arg2[%c0, %c0_1] : memref<128x72xbf16, #tpu.memory_space<vmem>>, vector<128x72xbf16>
    %c0_2 = arith.constant 0 : index
    %c0_3 = arith.constant 0 : index
    %4 = vector.load %arg3[%c0_2, %c0_3] : memref<72x64xbf16, #tpu.memory_space<vmem>>, vector<72x64xbf16>
    %cst = arith.constant dense<0.000000e+00> : vector<128x64xf32>
    %5 = tpu.matmul %3, %4, %cst {dimension_numbers = #tpu.dot_dimension_numbers<[1], [0], [0], [1], [0, 0, 1, 1], [], []>} : vector<128x72xbf16>, vector<72x64xbf16>, vector<128x64xf32> -> vector<128x64xf32>
    %c0_4 = arith.constant 0 : index
    %c0_5 = arith.constant 0 : index
    %6 = vector.load %arg4[%c0_4, %c0_5] : memref<1x64xf32, #tpu.memory_space<vmem>>, vector<1x64xf32>
    %7 = vector.broadcast %6 : vector<1x64xf32> to vector<128x64xf32>
    %8 = arith.addf %5, %7 : vector<128x64xf32>
    %cst_6 = arith.constant 0.000000e+00 : f32
    %9 = vector.broadcast %cst_6 : f32 to vector<128x64xf32>
    %10 = arith.maximumf %8, %9 : vector<128x64xf32>
    %c0_7 = arith.constant 0 : index
    %c0_8 = arith.constant 0 : index
    %11 = vector.load %arg8[%c0_7, %c0_8] : memref<1x64xf32, #tpu.memory_space<vmem>>, vector<1x64xf32>
    %cst_9 = arith.constant dense<0.000000e+00> : vector<64xf32>
    %12 = vector.multi_reduction <add>, %10, %cst_9 [0] : vector<128x64xf32> to vector<64xf32>
    %13 = vector.shape_cast %12 : vector<64xf32> to vector<1x64xf32>
    %14 = arith.addf %11, %13 : vector<1x64xf32>
    %c0_10 = arith.constant 0 : index
    %c0_11 = arith.constant 0 : index
    %15 = vector.load %arg8[%c0_10, %c0_11] : memref<1x64xf32, #tpu.memory_space<vmem>>, vector<1x64xf32>
    tpu.vector_store %arg8[%c0_10, %c0_11], %14 {strides = array<i32>} : memref<1x64xf32, #tpu.memory_space<vmem>>, vector<1x64xf32>,
    %c1_i32 = arith.constant 1 : i32
    %16 = arith.cmpi eq, %arg1, %c1_i32 : i32
    %17 = arith.extui %16 : i1 to i32
    %c0_i32_12 = arith.constant 0 : i32
    %18 = arith.cmpi ne, %17, %c0_i32_12 : i32
    scf.if %18 {
      %c0_13 = arith.constant 0 : index
      %c0_14 = arith.constant 0 : index
      %19 = vector.load %arg8[%c0_13, %c0_14] : memref<1x64xf32, #tpu.memory_space<vmem>>, vector<1x64xf32>
      %cst_15 = arith.constant 3.906250e-03 : f32
      %20 = vector.broadcast %cst_15 : f32 to vector<1x64xf32>
      %21 = arith.mulf %19, %20 : vector<1x64xf32>
      %c0_16 = arith.constant 0 : index
      %c0_17 = arith.constant 0 : index
      %22 = vector.load %arg5[%c0_16, %c0_17] : memref<64x128xf32, #tpu.memory_space<vmem>>, vector<64x128xf32>
      %cst_18 = arith.constant dense<0.000000e+00> : vector<1x128xf32>
      %23 = tpu.matmul %21, %22, %cst_18 {dimension_numbers = #tpu.dot_dimension_numbers<[1], [0], [0], [1], [0, 0, 1, 1], [], []>} : vector<1x64xf32>, vector<64x128xf32>, vector<1x128xf32> -> vector<1x128xf32>
      %c0_19 = arith.constant 0 : index
      %c0_20 = arith.constant 0 : index
      %24 = vector.load %arg6[%c0_19, %c0_20] : memref<1x128xf32, #tpu.memory_space<vmem>>, vector<1x128xf32>
      %25 = arith.addf %23, %24 : vector<1x128xf32>
      %26 = vector.shape_cast %25 : vector<1x128xf32> to vector<1x1x128xf32>
      %27 = vector.shape_cast %26 : vector<1x1x128xf32> to vector<1x1x128xf32>
      %28 = vector.broadcast %27 : vector<1x1x128xf32> to vector<1x8x128xf32>
      %c0_21 = arith.constant 0 : index
      %c0_22 = arith.constant 0 : index
      %c0_23 = arith.constant 0 : index
      %29 = vector.load %arg7[%c0_21, %c0_22, %c0_23] : memref<1x8x128xf32, #tpu.memory_space<vmem>>, vector<1x8x128xf32>
      tpu.vector_store %arg7[%c0_21, %c0_22, %c0_23], %28 {strides = array<i32>} : memref<1x8x128xf32, #tpu.memory_space<vmem>>, vector<1x8x128xf32>,
    } else {
    }
    return
  }
  func.func @transform_0(%arg0: i32, %arg1: i32) -> (i32, i32) {
    %c2_i32 = arith.constant 2 : i32
    %0 = arith.muli %arg0, %c2_i32 : i32
    %1 = arith.addi %0, %arg1 : i32
    %c0_i32 = arith.constant 0 : i32
    %c0_i32_0 = arith.constant 0 : i32
    return %1, %c0_i32 : i32, i32
  }
  func.func @transform_1(%arg0: i32, %arg1: i32) -> (i32, i32) {
    %c0_i32 = arith.constant 0 : i32
    %c0_i32_0 = arith.constant 0 : i32
    %c0_i32_1 = arith.constant 0 : i32
    return %c0_i32, %c0_i32_0 : i32, i32
  }
  func.func @transform_2(%arg0: i32, %arg1: i32) -> (i32, i32) {
    %c0_i32 = arith.constant 0 : i32
    %c0_i32_0 = arith.constant 0 : i32
    %c0_i32_1 = arith.constant 0 : i32
    return %c0_i32, %c0_i32_0 : i32, i32
  }
  func.func @transform_3(%arg0: i32, %arg1: i32) -> (i32, i32) {
    %c0_i32 = arith.constant 0 : i32
    %c0_i32_0 = arith.constant 0 : i32
    %c0_i32_1 = arith.constant 0 : i32
    return %c0_i32, %c0_i32_0 : i32, i32
  }
  func.func @transform_4(%arg0: i32, %arg1: i32) -> (i32, i32) {
    %c0_i32 = arith.constant 0 : i32
    %c0_i32_0 = arith.constant 0 : i32
    %c0_i32_1 = arith.constant 0 : i32
    return %c0_i32, %c0_i32_0 : i32, i32
  }
  func.func @transform_5(%arg0: i32, %arg1: i32) -> (i32, i32, i32) {
    %c0_i32 = arith.constant 0 : i32
    %c0_i32_0 = arith.constant 0 : i32
    %c0_i32_1 = arith.constant 0 : i32
    return %arg0, %c0_i32, %c0_i32_0 : i32, i32, i32
  }
}

</mosaic_0001>

<llo_original>
// kernel: tpu_custom_call.1
$region0: #{tpu_custom_call.1}
  #allocation0 [shape = 'u32[]', space=smem, size = 0x4, offset = 0x4, fixed_abs, tag = 'smem constant byte address 0x4 - core index']
  #allocation1 [shape = 'u32[144,128]{1,0:T(1,128)}', space=vmem, size = 0x12000, scoped, tag = 'internal scratch']
  #allocation2 [shape = 'f32[1,64]{1,0:T(1,128)}', space=vmem, size = 0x200, scoped, tag = 'scratch operand']
  %s0 = inlined_call_operand.vmem [shape: bf16[512,72], index: 0, kind: input, shape index: {}]
  %s1 = inlined_call_operand.vmem [shape: bf16[72,64], index: 1, kind: input, shape index: {}]
  %s2 = inlined_call_operand.vmem [shape: f32[1,64], index: 2, kind: input, shape index: {}]
  %s3 = inlined_call_operand.vmem [shape: f32[64,128], index: 3, kind: input, shape index: {}]
  %s4 = inlined_call_operand.vmem [shape: f32[1,128], index: 4, kind: input, shape index: {}]
  %s5 = inlined_call_operand.hbm [shape: f32[2,8,128], index: 5, kind: output, shape index: {}]
  %s6 = sld [smem:[#allocation0]]
  $region61: #{tpu_custom_call.1} parent=0
    _
  %s8 = ssub.s32 1, %s6
  %s9 = scalar_select 0, %s8, %s6
  $region1: #{tpu_custom_call.1} parent=0
    #allocation3 [shape = 'u8[8192]{0}', space=vmem, size = 0x2000, scoped, tag = 'output window, operand 0']
    #allocation4 [shape = 's32[2]{0}', space=sflag, size = 0x8, scoped, tag = 'scoped memory for tpu_custom_call.1']
    %10 = vsyncpa [#allocation4], 0
    %s11 = scalar_lea.sflag [#allocation4], 1
    %12 = vsyncpa %s11, 0
    loop: start=0, step=1, limit=6
    $region2: #{tpu_custom_call.1} parent=1 // loop_pre_header
      _
    $region3: #{tpu_custom_call.1} parent=1 // loop_header
      %s14 = sphi 0, %s18
      %p15 = scmp.ge.s32.totalorder %s14, 6
      %s21 = sphi 0, %s33
      %s22 = sphi 0, %s29
      %s23 = sphi 0, %s21
      %s24 = sphi 0, %s22
      %s25 = sphi 0, %s23
      %s26 = sphi 0, %s24
      %s40 = sphi 0, %s42
      %s43 = sphi 0, %s40
      %s44 = sphi 0, %s43
      %s60 = sphi 0, %s44
      %s64 = sphi 0, %s64
      %s66 = sphi 0, %s64
      %s67 = sphi 0, %s66
      %s81 = sphi 0, %s67
      %s85 = sphi 0, %s85
      %s87 = sphi 0, %s85
      %s88 = sphi 0, %s87
      %s102 = sphi 0, %s88
      %s106 = sphi 0, %s106
      %s108 = sphi 0, %s106
      %s109 = sphi 0, %s108
      %s123 = sphi 0, %s109
      %s127 = sphi 0, %s127
      %s129 = sphi 0, %s127
      %s130 = sphi 0, %s129
      %s144 = sphi 0, %s130
      %s150 = sphi 0, %s152
      %s153 = sphi 0, %s150
      %s154 = sphi 0, %s153
      %s170 = sphi 0, %s154
    $region4: #{tpu_custom_call.1} parent=1 // loop_header_branch
      %17 = sbr.rel (%p15) target = $region8
    $region5: #{tpu_custom_call.1} parent=1 // loop_body
      %s19 = ssub.s32 %s14, 1
      %s20 = ssub.s32 %s14, 2
      %s27 = sadd.s32 1, %s22
      %p28 = scmp.ge.s32.totalorder %s27, 2
      %s29 = scalar_select %p28, 0, %s27
      %s30 = sadd.s32 1, %s21
      %s31 = scalar_select %p28, %s30, %s21
      %p32 = scmp.ge.s32.totalorder %s31, 2
      %s33 = scalar_select %p32, 0, %s31
      %s34 = smul.u32 %s21, 2
      %s35 = sadd.s32 %s34, %s22
      %s36 = smul.u32 %s33, 2
      %s37 = sadd.s32 %s36, %s29
      %s38 = ssub.s32 %s35, %s37
      %p39 = scmp.eq.s32.totalorder %s38, 0
      %s41 = sadd.s32 %s40, 1
      %s42 = scalar_select %p39, %s40, %s41
      %p45 = pneg %p39
      %p46 = scmp.eq.s32.totalorder %s14, 3
      %p47 = por %p45, %p46
      %p48 = scmp.ne.s32.totalorder %s40, %s43
      %p49 = scmp.eq.s32.totalorder %s14, 0
      %p50 = por %p48, %p49
      %p51 = scmp.ne.s32.totalorder %s40, %s43
      %p52 = scmp.eq.s32.totalorder %s19, 3
      %p53 = por %p51, %p52
      %p54 = scmp.ne.s32.totalorder %s43, %s44
      %p55 = scmp.eq.s32.totalorder %s19, 0
      %p56 = por %p54, %p55
      %p57 = scmp.ne.s32.totalorder %s43, %s44
      %p58 = scmp.eq.s32.totalorder %s20, 3
      %p59 = por %p57, %p58
      %p61 = scmp.ne.s32.totalorder %s44, %s60
      %p62 = scmp.eq.s32.totalorder %s20, 0
      %p63 = por %p61, %p62
      %s65 = sadd.s32 %s64, 1
      %p68 = scmp.eq.s32.totalorder %s14, 3
      %p69 = scmp.ne.s32.totalorder %s64, %s66
      %p70 = scmp.eq.s32.totalorder %s14, 0
      %p71 = por %p69, %p70
      %p72 = scmp.ne.s32.totalorder %s64, %s66
      %p73 = scmp.eq.s32.totalorder %s19, 3
      %p74 = por %p72, %p73
      %p75 = scmp.ne.s32.totalorder %s66, %s67
      %p76 = scmp.eq.s32.totalorder %s19, 0
      %p77 = por %p75, %p76
      %p78 = scmp.ne.s32.totalorder %s66, %s67
      %p79 = scmp.eq.s32.totalorder %s20, 3
      %p80 = por %p78, %p79
      %p82 = scmp.ne.s32.totalorder %s67, %s81
      %p83 = scmp.eq.s32.totalorder %s20, 0
      %p84 = por %p82, %p83
      %s86 = sadd.s32 %s85, 1
      %p89 = scmp.eq.s32.totalorder %s14, 3
      %p90 = scmp.ne.s32.totalorder %s85, %s87
      %p91 = scmp.eq.s32.totalorder %s14, 0
      %p92 = por %p90, %p91
      %p93 = scmp.ne.s32.totalorder %s85, %s87
      %p94 = scmp.eq.s32.totalorder %s19, 3
      %p95 = por %p93, %p94
      %p96 = scmp.ne.s32.totalorder %s87, %s88
      %p97 = scmp.eq.s32.totalorder %s19, 0
      %p98 = por %p96, %p97
      %p99 = scmp.ne.s32.totalorder %s87, %s88
      %p100 = scmp.eq.s32.totalorder %s20, 3
      %p101 = por %p99, %p100
      %p103 = scmp.ne.s32.totalorder %s88, %s102
      %p104 = scmp.eq.s32.totalorder %s20, 0
      %p105 = por %p103, %p104
      %s107 = sadd.s32 %s106, 1
      %p110 = scmp.eq.s32.totalorder %s14, 3
      %p111 = scmp.ne.s32.totalorder %s106, %s108
      %p112 = scmp.eq.s32.totalorder %s14, 0
      %p113 = por %p111, %p112
      %p114 = scmp.ne.s32.totalorder %s106, %s108
      %p115 = scmp.eq.s32.totalorder %s19, 3
      %p116 = por %p114, %p115
      %p117 = scmp.ne.s32.totalorder %s108, %s109
      %p118 = scmp.eq.s32.totalorder %s19, 0
      %p119 = por %p117, %p118
      %p120 = scmp.ne.s32.totalorder %s108, %s109
      %p121 = scmp.eq.s32.totalorder %s20, 3
      %p122 = por %p120, %p121
      %p124 = scmp.ne.s32.totalorder %s109, %s123
      %p125 = scmp.eq.s32.totalorder %s20, 0
      %p126 = por %p124, %p125
      %s128 = sadd.s32 %s127, 1
      %p131 = scmp.eq.s32.totalorder %s14, 3
      %p132 = scmp.ne.s32.totalorder %s127, %s129
      %p133 = scmp.eq.s32.totalorder %s14, 0
      %p134 = por %p132, %p133
      %p135 = scmp.ne.s32.totalorder %s127, %s129
      %p136 = scmp.eq.s32.totalorder %s19, 3
      %p137 = por %p135, %p136
      %p138 = scmp.ne.s32.totalorder %s129, %s130
      %p139 = scmp.eq.s32.totalorder %s19, 0
      %p140 = por %p138, %p139
      %p141 = scmp.ne.s32.totalorder %s129, %s130
      %p142 = scmp.eq.s32.totalorder %s20, 3
      %p143 = por %p141, %p142
      %p145 = scmp.ne.s32.totalorder %s130, %s144
      %p146 = scmp.eq.s32.totalorder %s20, 0
      %p147 = por %p145, %p146
      %s148 = ssub.s32 %s21, %s33
      %p149 = scmp.eq.s32.totalorder %s148, 0
      %s151 = sadd.s32 %s150, 1
      %s152 = scalar_select %p149, %s150, %s151
      %p155 = pneg %p149
      %p156 = scmp.eq.s32.totalorder %s14, 3
      %p157 = por %p155, %p156
      %p158 = scmp.ne.s32.totalorder %s150, %s153
      %p159 = scmp.eq.s32.totalorder %s14, 0
      %p160 = por %p158, %p159
      %p161 = scmp.ne.s32.totalorder %s150, %s153
      %p162 = scmp.eq.s32.totalorder %s19, 3
      %p163 = por %p161, %p162
      %p164 = scmp.ne.s32.totalorder %s153, %s154
      %p165 = scmp.eq.s32.totalorder %s19, 0
      %p166 = por %p164, %p165
      %p167 = scmp.ne.s32.totalorder %s153, %s154
      %p168 = scmp.eq.s32.totalorder %s20, 3
      %p169 = por %p167, %p168
      %p171 = scmp.ne.s32.totalorder %s154, %s170
      %p172 = scmp.eq.s32.totalorder %s20, 0
      %p173 = por %p171, %p172
      %p174 = scmp.le.s32.totalorder 1, %s14
      %p175 = scmp.lt.s32.totalorder %s14, 5
      %p176 = pnand %p174, %p175
      %p177 = pneg %p176
      // Predicated region
      $region9: #{tpu_custom_call.1} parent=5 // pred_check
        _
      $region10: #{tpu_custom_call.1} parent=5 // pred_check_branch
        %179 = sbr.rel (%p176) target = $region12
      $region11: #{tpu_custom_call.1} parent=5 // pred_region
        %s180 = ssub.s32 %s14, 1
        // Predicated region
        $region13: #{tpu_custom_call.1} parent=11 // pred_check
          %p181 = pneg %p77
        $region14: #{tpu_custom_call.1} parent=11 // pred_check_branch
          %183 = sbr.rel (%p181) target = $region16
        $region15: #{tpu_custom_call.1} parent=11 // pred_region
          _
        $region16: #{tpu_custom_call.1} parent=11 // pred_fallthru
          _
        // Predicated region
        $region17: #{tpu_custom_call.1} parent=11 // pred_check
          %p184 = pneg %p98
        $region18: #{tpu_custom_call.1} parent=11 // pred_check_branch
          %186 = sbr.rel (%p184) target = $region20
        $region19: #{tpu_custom_call.1} parent=11 // pred_region
          _
        $region20: #{tpu_custom_call.1} parent=11 // pred_fallthru
          _
        // Predicated region
        $region21: #{tpu_custom_call.1} parent=11 // pred_check
          %p187 = pneg %p119
        $region22: #{tpu_custom_call.1} parent=11 // pred_check_branch
          %189 = sbr.rel (%p187) target = $region24
        $region23: #{tpu_custom_call.1} parent=11 // pred_region
          _
        $region24: #{tpu_custom_call.1} parent=11 // pred_fallthru
          _
        // Predicated region
        $region25: #{tpu_custom_call.1} parent=11 // pred_check
          %p190 = pneg %p140
        $region26: #{tpu_custom_call.1} parent=11 // pred_check_branch
          %192 = sbr.rel (%p190) target = $region28
        $region27: #{tpu_custom_call.1} parent=11 // pred_region
          _
        $region28: #{tpu_custom_call.1} parent=11 // pred_fallthru
          _
      $region12: #{tpu_custom_call.1} parent=5 // pred_fallthru
        _
      %p193 = scmp.lt.s32.totalorder %s14, 4
      // Predicated region
      $region29: #{tpu_custom_call.1} parent=5 // pred_check
        %p194 = pneg %p193
      $region30: #{tpu_custom_call.1} parent=5 // pred_check_branch
        %196 = sbr.rel (%p194) target = $region32
      $region31: #{tpu_custom_call.1} parent=5 // pred_region
        // Predicated region
        $region33: #{tpu_custom_call.1} parent=31 // pred_check
          %p197 = pneg %p50
        $region34: #{tpu_custom_call.1} parent=31 // pred_check_branch
          %199 = sbr.rel (%p197) target = $region36
        $region35: #{tpu_custom_call.1} parent=31 // pred_region
          %s200 = smul.u32 %s21, 2
          %s201 = sadd.s32 %s200, %s22
          %s202 = smul.u32 16, %s201
          %p203 = scmp.lt.s32.totalorder %s202, 63
          %s204 = scalar_select %p203, %s202, 63
          %s205 = smul.addr %s204, 4
          %s206 = scalar_lea.vmem %s0, %s205
          %s207 = smul.u32 %s21, 2
          %s208 = sadd.s32 %s207, %s22
          %s209 = smul.u32 16, %s208
        $region36: #{tpu_custom_call.1} parent=31 // pred_fallthru
          _
      $region32: #{tpu_custom_call.1} parent=5 // pred_fallthru
        _
      %p210 = scmp.le.s32.totalorder 1, %s14
      %p211 = scmp.lt.s32.totalorder %s14, 5
      %p212 = pnand %p210, %p211
      %p213 = pneg %p212
      // Predicated region
      $region37: #{tpu_custom_call.1} parent=5 // pred_check
        _
      $region38: #{tpu_custom_call.1} parent=5 // pred_check_branch
        %215 = sbr.rel (%p212) target = $region40
      $region39: #{tpu_custom_call.1} parent=5 // pred_region
        %s216 = ssub.s32 %s14, 1
        %s217 = smul.u32 %s23, 2
        %s218 = sadd.s32 %s217, %s24
        %s219 = smul.u32 16, %s218
        %p220 = scmp.lt.s32.totalorder %s219, 63
        %s221 = scalar_select %p220, %s219, 63
        %s222 = smul.addr %s221, 4
        %s223 = scalar_lea.vmem %s0, %s222
        %p224 = pneg %p56
        %p225 = pneg %p53
        %p226 = pneg %p77
        %p227 = pneg %p74
        %p228 = pneg %p98
        %p229 = pneg %p95
        %p230 = pneg %p119
        %p231 = pneg %p116
        %p232 = pneg %p140
        %p233 = pneg %p137
        %p234 = pneg %p166
        %p235 = pneg %p163
        %s236 = sand.u32 %s153, 1
        %s237 = scalar_lea.sflag [#allocation4], %s236
        %s238 = sand.u32 %s153, 1
        %s239 = smul.addr %s238, 8
        %s240 = scalar_lea.vmem [#allocation3], %s239
        %s241 = smul.u32 %s23, 2
        %s242 = sadd.s32 %s241, %s24
        %s243 = smul.u32 16, %s242
        %p244 = scmp.lt.s32.totalorder %s243, 63
        %s245 = scalar_select %p244, %s243, 63
        %s246 = smul.addr %s245, 4
        %s247 = scalar_lea.vmem %s0, %s246
        %s248 = smul.u32 %s23, 2
        %s249 = sadd.s32 %s248, %s24
        %s250 = smul.u32 16, %s249
        %p252 = scmp.eq.s32.totalorder %s24, 0
        // Predicated region
        $region41: #{tpu_custom_call.1} parent=39 // pred_check
          %p253 = pneg %p252
        $region42: #{tpu_custom_call.1} parent=39 // pred_check_branch
          %255 = sbr.rel (%p253) target = $region44
        $region43: #{tpu_custom_call.1} parent=39 // pred_region
          %vm256 = vcmask 516096
          %257 = vst.msk [vmem:[#allocation2] sm:$0x1] %vm256, 0.0
        $region44: #{tpu_custom_call.1} parent=39 // pred_fallthru
          _
        %v258 = vld [vmem:[%s247] sm:$0xf]
        %v259 = vld [vmem:[%s247 + $0x4] sm:$0xf]
        %v260 = vld [vmem:[%s247 + $0x8] sm:$0xf]
        %v261 = vld [vmem:[%s247 + $0xc] sm:$0xf]
        %v262 = vld [vmem:[%s247 + $0x10] sm:$0xf]
        %v263 = vld [vmem:[%s247 + $0x14] sm:$0xf]
        %v264 = vld [vmem:[%s247 + $0x18] sm:$0xf]
        %v265 = vld [vmem:[%s247 + $0x1c] sm:$0xf]
        %v266 = vld [vmem:[%s247 + $0x20] sm:$0xf]
        %v267 = vld [vmem:[%s247 + $0x24] sm:$0xf]
        %v268 = vld [vmem:[%s247 + $0x28] sm:$0xf]
        %v269 = vld [vmem:[%s247 + $0x2c] sm:$0xf]
        %v270 = vld [vmem:[%s247 + $0x30] sm:$0xf]
        %v271 = vld [vmem:[%s247 + $0x34] sm:$0xf]
        %v272 = vld [vmem:[%s247 + $0x38] sm:$0xf]
        %v273 = vld [vmem:[%s247 + $0x3c] sm:$0xf]
        %v274 = vld [vmem:[%s1] sm:$0xf]
        %v275 = vld [vmem:[%s1 + $0x4] sm:$0xf]
        %v276 = vld [vmem:[%s1 + $0x8] sm:$0xf]
        %v277 = vld [vmem:[%s1 + $0xc] sm:$0xf]
        %v278 = vld [vmem:[%s1 + $0x10] sm:$0xf]
        %v279 = vld [vmem:[%s1 + $0x14] sm:$0xf]
        %v280 = vld [vmem:[%s1 + $0x18] sm:$0xf]
        %v281 = vld [vmem:[%s1 + $0x1c] sm:$0xf]
        %v282 = vld [vmem:[%s1 + $0x20] sm:$0xf]
        %v283 = vld [vmem:[%s2] sm:$0x1]
        %v285 = vlaneseq
        %v286 = vshrl.u32 %v285, 7
        %v287 = vsub.s32 0, %v286
        %v288 = vrot.slane %v283, %v287
        %v306 = vunpack.c.l.b16 %v258
        %v307 = vunpack.c.l.b16 %v259
        %v308 = vunpack.c.l.b16 %v260
        %v309 = vunpack.c.l.b16 %v261
        %v310 = vunpack.c.l.b16 %v262
        %v311 = vunpack.c.l.b16 %v263
        %v312 = vunpack.c.l.b16 %v264
        %v313 = vunpack.c.l.b16 %v265
        %v314 = vunpack.c.l.b16 %v266
        %v315 = vunpack.c.l.b16 %v267
        %v316 = vunpack.c.l.b16 %v268
        %v317 = vunpack.c.l.b16 %v269
        %v318 = vunpack.c.l.b16 %v270
        %v319 = vunpack.c.l.b16 %v271
        %v320 = vunpack.c.l.b16 %v272
        %v321 = vunpack.c.l.b16 %v273
        %v322 = vpack.c.b16 %v307, %v306
        %v323 = vpack.c.b16 %v309, %v308
        %v324 = vpack.c.b16 %v311, %v310
        %v325 = vpack.c.b16 %v313, %v312
        %v326 = vpack.c.b16 %v315, %v314
        %v327 = vpack.c.b16 %v317, %v316
        %v328 = vpack.c.b16 %v319, %v318
        %v329 = vpack.c.b16 %v321, %v320
        %v339 = vunpack.c.l.b16 %v274
        %v340 = vunpack.c.l.b16 %v275
        %v341 = vunpack.c.l.b16 %v276
        %v342 = vunpack.c.l.b16 %v277
        %v343 = vunpack.c.l.b16 %v278
        %v344 = vunpack.c.l.b16 %v279
        %v345 = vunpack.c.l.b16 %v280
        %v346 = vunpack.c.l.b16 %v281
        %v347 = vunpack.c.l.b16 %v282
        %v348 = vpack.c.b16 %v340, %v339
        %v349 = vpack.c.b16 %v342, %v341
        %v350 = vpack.c.b16 %v344, %v343
        %v351 = vpack.c.b16 %v346, %v345
        %v352 = vpack.c.b16 %v347, %v347
        %vm357 = vcmask 588800
        %v359 = vsel %vm357, %v322, 0
        %v362 = vsel %vm357, %v323, 0
        %v365 = vsel %vm357, %v324, 0
        %v368 = vsel %vm357, %v325, 0
        %v371 = vsel %vm357, %v326, 0
        %v374 = vsel %vm357, %v327, 0
        %v377 = vsel %vm357, %v328, 0
        %v380 = vsel %vm357, %v329, 0
        %vm382 = vcmask 1043456
        %v384 = vsel %vm382, %v352, 0
        %386 = vmatprep.subr.bf16.mxu0 0
        %387 = vmatpush1.bf16.msra.mxu0 0
        %388 = vmatprep.subr.bf16.mxu0 0
        %389 = vmatpush1.bf16.msra.mxu0 0
        %390 = vmatprep.subr.bf16.mxu0 0
        %391 = vmatpush1.bf16.msra.mxu0 0
        %392 = vmatprep.subr.bf16.mxu0 0
        %393 = vmatpush1.bf16.msra.mxu0 %v384
        %394 = vmatprep.subr.bf16.mxu0 0
        %395 = vmatpush1.bf16.msra.mxu0 %v351
        %396 = vmatprep.subr.bf16.mxu0 0
        %397 = vmatpush1.bf16.msra.mxu0 %v350
        %398 = vmatprep.subr.bf16.mxu0 0
        %399 = vmatpush1.bf16.msra.mxu0 %v349
        %400 = vmatprep.subr.bf16.mxu0 0
        %401 = vmatpush1.bf16.msra.mxu0 %v348
        %402 = vmatprep.subr.bf16.mxu0 0
        %403 = vmatpush2.bf16.msra.mxu0 0
        %404 = vmatprep.subr.bf16.mxu0 0
        %405 = vmatpush2.bf16.msra.mxu0 0
        %406 = vmatprep.subr.bf16.mxu0 0
        %407 = vmatpush2.bf16.msra.mxu0 0
        %408 = vmatprep.subr.bf16.mxu0 0
        %409 = vmatpush2.bf16.msra.mxu0 0
        %410 = vmatprep.subr.bf16.mxu0 0
        %411 = vmatpush2.bf16.msra.mxu0 0
        %412 = vmatprep.subr.bf16.mxu0 0
        %413 = vmatpush2.bf16.msra.mxu0 0
        %414 = vmatprep.subr.bf16.mxu0 0
        %415 = vmatpush2.bf16.msra.mxu0 0
        %416 = vmatprep.subr.bf16.mxu0 0
        %417 = vmatpush2.bf16.msra.mxu0 0
        %418 = vmatprep.mubr.bf16.mxu0 0
        %419 = vmatmul.mubr.bf16.gmra.mxu0 %v359
        %v420 = vpop.f32.mrf.mxu0
        %v421 = vadd.f32 %v288, %v420
        %v422 = vpop.f32.mrf.mxu0
        %v423 = vpop.f32.mrf.mxu0
        %v424 = vadd.f32 %v288, %v423
        %v425 = vpop.f32.mrf.mxu0
        %426 = vmatprep.mubr.bf16.mxu0 0
        %427 = vmatmul.mubr.bf16.gmra.mxu0 %v362
        %v428 = vpop.f32.mrf.mxu0
        %v429 = vadd.f32 %v288, %v428
        %v430 = vpop.f32.mrf.mxu0
        %v431 = vpop.f32.mrf.mxu0
        %v432 = vadd.f32 %v288, %v431
        %v433 = vpop.f32.mrf.mxu0
        %434 = vmatprep.mubr.bf16.mxu0 0
        %435 = vmatmul.mubr.bf16.gmra.mxu0 %v365
        %v436 = vpop.f32.mrf.mxu0
        %v437 = vadd.f32 %v288, %v436
        %v438 = vpop.f32.mrf.mxu0
        %v439 = vpop.f32.mrf.mxu0
        %v440 = vadd.f32 %v288, %v439
        %v441 = vpop.f32.mrf.mxu0
        %442 = vmatprep.mubr.bf16.mxu0 0
        %443 = vmatmul.mubr.bf16.gmra.mxu0 %v368
        %v444 = vpop.f32.mrf.mxu0
        %v445 = vadd.f32 %v288, %v444
        %v446 = vpop.f32.mrf.mxu0
        %v447 = vpop.f32.mrf.mxu0
        %v448 = vadd.f32 %v288, %v447
        %v449 = vpop.f32.mrf.mxu0
        %450 = vmatprep.mubr.bf16.mxu0 0
        %451 = vmatmul.mubr.bf16.gmra.mxu0 %v371
        %v452 = vpop.f32.mrf.mxu0
        %v453 = vadd.f32 %v288, %v452
        %v454 = vpop.f32.mrf.mxu0
        %v455 = vpop.f32.mrf.mxu0
        %v456 = vadd.f32 %v288, %v455
        %v457 = vpop.f32.mrf.mxu0
        %458 = vmatprep.mubr.bf16.mxu0 0
        %459 = vmatmul.mubr.bf16.gmra.mxu0 %v374
        %v460 = vpop.f32.mrf.mxu0
        %v461 = vadd.f32 %v288, %v460
        %v462 = vpop.f32.mrf.mxu0
        %v463 = vpop.f32.mrf.mxu0
        %v464 = vadd.f32 %v288, %v463
        %v465 = vpop.f32.mrf.mxu0
        %466 = vmatprep.mubr.bf16.mxu0 0
        %467 = vmatmul.mubr.bf16.gmra.mxu0 %v377
        %v468 = vpop.f32.mrf.mxu0
        %v469 = vadd.f32 %v288, %v468
        %v470 = vpop.f32.mrf.mxu0
        %v471 = vpop.f32.mrf.mxu0
        %v472 = vadd.f32 %v288, %v471
        %v473 = vpop.f32.mrf.mxu0
        %474 = vmatprep.mubr.bf16.mxu0 0
        %475 = vmatmul.mubr.bf16.gmra.mxu0 %v380
        %v476 = vpop.f32.mrf.mxu0
        %v477 = vadd.f32 %v288, %v476
        %v478 = vpop.f32.mrf.mxu0
        %v479 = vpop.f32.mrf.mxu0
        %v480 = vadd.f32 %v288, %v479
        %v481 = vpop.f32.mrf.mxu0
        %482 = vdwg.mxu0
        %v483 = vmax.f32 %v421, 0.0
        %v484 = vmax.f32 %v424, 0.0
        %v485 = vmax.f32 %v429, 0.0
        %v486 = vmax.f32 %v432, 0.0
        %v487 = vmax.f32 %v437, 0.0
        %v488 = vmax.f32 %v440, 0.0
        %v489 = vmax.f32 %v445, 0.0
        %v490 = vmax.f32 %v448, 0.0
        %v491 = vmax.f32 %v453, 0.0
        %v492 = vmax.f32 %v456, 0.0
        %v493 = vmax.f32 %v461, 0.0
        %v494 = vmax.f32 %v464, 0.0
        %v495 = vmax.f32 %v469, 0.0
        %v496 = vmax.f32 %v472, 0.0
        %v497 = vmax.f32 %v477, 0.0
        %v498 = vmax.f32 %v480, 0.0
        %v499 = vld [vmem:[#allocation2] sm:$0x1]
        %vm500 = vcmask 523264
        %v501 = vsel %vm500, %v483, 0.0
        %v502 = vsel %vm500, %v484, 0.0
        %v503 = vadd.f32 %v501, %v502
        %v504 = vsel %vm500, %v485, 0.0
        %v505 = vadd.f32 %v503, %v504
        %v506 = vsel %vm500, %v486, 0.0
        %v507 = vadd.f32 %v505, %v506
        %v508 = vsel %vm500, %v487, 0.0
        %v509 = vadd.f32 %v507, %v508
        %v510 = vsel %vm500, %v488, 0.0
        %v511 = vadd.f32 %v509, %v510
        %v512 = vsel %vm500, %v489, 0.0
        %v513 = vadd.f32 %v511, %v512
        %v514 = vsel %vm500, %v490, 0.0
        %v515 = vadd.f32 %v513, %v514
        %v516 = vsel %vm500, %v491, 0.0
        %v517 = vadd.f32 %v515, %v516
        %v518 = vsel %vm500, %v492, 0.0
        %v519 = vadd.f32 %v517, %v518
        %v520 = vsel %vm500, %v493, 0.0
        %v521 = vadd.f32 %v519, %v520
        %v522 = vsel %vm500, %v494, 0.0
        %v523 = vadd.f32 %v521, %v522
        %v524 = vsel %vm500, %v495, 0.0
        %v525 = vadd.f32 %v523, %v524
        %v526 = vsel %vm500, %v496, 0.0
        %v527 = vadd.f32 %v525, %v526
        %v528 = vsel %vm500, %v497, 0.0
        %v529 = vadd.f32 %v527, %v528
        %v530 = vsel %vm500, %v498, 0.0
        %v531 = vadd.f32 %v529, %v530
        %v532 = vrot.slane %v531, 4
        %v533 = vadd.f32 %v531, %v532
        %v534 = vrot.slane %v533, 2
        %v535 = vadd.f32 %v533, %v534
        %v536 = vrot.slane %v535, 1
        %v537 = vadd.f32 %v535, %v536
        %v538 = vadd.f32 %v499, %v537
        %vm539 = vcmask 516096
        %540 = vst.msk [vmem:[#allocation2] sm:$0x1] %vm539, %v538
        %p541 = scmp.eq.s32.totalorder %s24, 1
        // Predicated region
        $region45: #{tpu_custom_call.1} parent=39 // pred_check
          %p542 = pneg %p541
        $region46: #{tpu_custom_call.1} parent=39 // pred_check_branch
          %544 = sbr.rel (%p542) target = $region48
        $region47: #{tpu_custom_call.1} parent=39 // pred_region
          %v545 = vld [vmem:[#allocation2] sm:$0x1]
          %v546 = vmul.f32 %v545, 0.00390625
          %v547 = vld [vmem:[%s3] sm:$0xff]
          %v548 = vld [vmem:[%s3 + $0x8] sm:$0xff]
          %v549 = vld [vmem:[%s3 + $0x10] sm:$0xff]
          %v550 = vld [vmem:[%s3 + $0x18] sm:$0xff]
          %v551 = vld [vmem:[%s3 + $0x20] sm:$0xff]
          %v552 = vld [vmem:[%s3 + $0x28] sm:$0xff]
          %v553 = vld [vmem:[%s3 + $0x30] sm:$0xff]
          %v554 = vld [vmem:[%s3 + $0x38] sm:$0xff]
          %v555 = vld [vmem:[%s4] sm:$0x1]
          %v557 = vsel %vm500, %v546, 0
          %559 = vmatprep.subr.mxu0 0.0
          %560 = vmatpush1.msra.mxu0 0.0
          %561 = vmatprep.subr.mxu0 0.0
          %562 = vmatpush1.msra.mxu0 0.0
          %563 = vmatprep.subr.mxu0 0.0
          %564 = vmatpush1.msra.mxu0 0.0
          %565 = vmatprep.subr.mxu0 0.0
          %566 = vmatpush1.msra.mxu0 0.0
          %567 = vmatprep.subr.mxu0 0.0
          %568 = vmatpush1.msra.mxu0 0.0
          %569 = vmatprep.subr.mxu0 0.0
          %570 = vmatpush1.msra.mxu0 0.0
          %571 = vmatprep.subr.mxu0 0.0
          %572 = vmatpush1.msra.mxu0 0.0
          %573 = vmatprep.subr.mxu0 0.0
          %574 = vmatpush1.msra.mxu0 0.0
          %575 = vmatprep.subr.mxu0 0.0
          %576 = vmatpush1.msra.mxu0 %v554
          %577 = vmatprep.subr.mxu0 0.0
          %578 = vmatpush1.msra.mxu0 %v553
          %579 = vmatprep.subr.mxu0 0.0
          %580 = vmatpush1.msra.mxu0 %v552
          %581 = vmatprep.subr.mxu0 0.0
          %582 = vmatpush1.msra.mxu0 %v551
          %583 = vmatprep.subr.mxu0 0.0
          %584 = vmatpush1.msra.mxu0 %v550
          %585 = vmatprep.subr.mxu0 0.0
          %586 = vmatpush1.msra.mxu0 %v549
          %587 = vmatprep.subr.mxu0 0.0
          %588 = vmatpush1.msra.mxu0 %v548
          %589 = vmatprep.subr.mxu0 0.0
          %590 = vmatpush1.msra.mxu0 %v547
          %591 = vmatprep.subr.mxu0 0.0
          %592 = vmatpush2.msra.mxu0 0.0
          %593 = vmatprep.subr.mxu0 0.0
          %594 = vmatpush2.msra.mxu0 0.0
          %595 = vmatprep.subr.mxu0 0.0
          %596 = vmatpush2.msra.mxu0 0.0
          %597 = vmatprep.subr.mxu0 0.0
          %598 = vmatpush2.msra.mxu0 0.0
          %599 = vmatprep.subr.mxu0 0.0
          %600 = vmatpush2.msra.mxu0 0.0
          %601 = vmatprep.subr.mxu0 0.0
          %602 = vmatpush2.msra.mxu0 0.0
          %603 = vmatprep.subr.mxu0 0.0
          %604 = vmatpush2.msra.mxu0 0.0
          %605 = vmatprep.subr.mxu0 0.0
          %606 = vmatpush2.msra.mxu0 0.0
          %607 = vmatprep.subr.mxu0 0.0
          %608 = vmatpush2.msra.mxu0 0.0
          %609 = vmatprep.subr.mxu0 0.0
          %610 = vmatpush2.msra.mxu0 0.0
          %611 = vmatprep.subr.mxu0 0.0
          %612 = vmatpush2.msra.mxu0 0.0
          %613 = vmatprep.subr.mxu0 0.0
          %614 = vmatpush2.msra.mxu0 0.0
          %615 = vmatprep.subr.mxu0 0.0
          %616 = vmatpush2.msra.mxu0 0.0
          %617 = vmatprep.subr.mxu0 0.0
          %618 = vmatpush2.msra.mxu0 0.0
          %619 = vmatprep.subr.mxu0 0.0
          %620 = vmatpush2.msra.mxu0 0.0
          %621 = vmatprep.subr.mxu0 0.0
          %622 = vmatpush2.msra.mxu0 0.0
          %623 = vmatprep.mubr.f32.mxu0 0.0
          %624 = vmatmul.mubr.f32.gmra.mxu0 %v557
          %v625 = vpop.f32.mrf.mxu0
          %v626 = vadd.f32 %v555, %v625
          %v627 = vpop.f32.mrf.mxu0
          %628 = vdwg.mxu0
          %v629 = vlaneseq
          %v630 = vshrl.u32 %v629, 7
          %v631 = vsub.s32 0, %v630
          %v632 = vrot.slane %v626, %v631
          %633 = vst [vmem:[%s240] sm:$0xff] %v632
        $region48: #{tpu_custom_call.1} parent=39 // pred_fallthru
          _
        %s634 = sand.u32 %s153, 1
        %s635 = scalar_lea.sflag [#allocation4], %s634
        %s636 = sand.u32 %s153, 1
        %s637 = smul.addr %s636, 8
        %s638 = scalar_lea.vmem [#allocation3], %s637
        // Predicated region
        $region49: #{tpu_custom_call.1} parent=39 // pred_check
          %p639 = pneg %p163
        $region50: #{tpu_custom_call.1} parent=39 // pred_check_branch
          %641 = sbr.rel (%p639) target = $region52
        $region51: #{tpu_custom_call.1} parent=39 // pred_region
          %s643 = ssub.s32 128, 128
          %644 = vsyncadd %s635, %s643
          %s645 = smul.addr %s23, 128
          %s646 = scalar_lea.hbm %s5, %s645
          %s648 = sshll.u32 %s638, 4
          %s649 = int_to_ptr.vmem [resolvable:$true] %s648
          %651 = dma.vmem_to_hbm [thread:$0]  %s649, 128, %s646, %s635
        $region52: #{tpu_custom_call.1} parent=39 // pred_fallthru
          _
      $region40: #{tpu_custom_call.1} parent=5 // pred_fallthru
        _
      %p652 = scmp.le.s32.totalorder 2, %s14
      // Predicated region
      $region53: #{tpu_custom_call.1} parent=5 // pred_check
        %p653 = pneg %p652
      $region54: #{tpu_custom_call.1} parent=5 // pred_check_branch
        %655 = sbr.rel (%p653) target = $region56
      $region55: #{tpu_custom_call.1} parent=5 // pred_region
        %s656 = ssub.s32 %s14, 2
        // Predicated region
        $region57: #{tpu_custom_call.1} parent=55 // pred_check
          %p657 = pneg %p169
        $region58: #{tpu_custom_call.1} parent=55 // pred_check_branch
          %659 = sbr.rel (%p657) target = $region60
        $region59: #{tpu_custom_call.1} parent=55 // pred_region
          %s660 = sand.u32 %s154, 1
          %s661 = scalar_lea.sflag [#allocation4], %s660
          %s662 = sand.u32 %s154, 1
          %s663 = smul.addr %s662, 8
          %s664 = scalar_lea.vmem [#allocation3], %s663
          %665 = dma.done %s661, 128
        $region60: #{tpu_custom_call.1} parent=55 // pred_fallthru
          _
      $region56: #{tpu_custom_call.1} parent=5 // pred_fallthru
        _
    $region6: #{tpu_custom_call.1} parent=1 // loop_footer
      %s18 = sadd.s32 1, %s14
    $region7: #{tpu_custom_call.1} parent=1 // loop_footer_branch
      %13 = sbr.rel target = $region3
    $region8: #{tpu_custom_call.1} parent=1 // loop_exit
      _
    %666 = vsyncpa [#allocation4], 1
    %s667 = scalar_lea.sflag [#allocation4], 1
    %668 = vsyncpa %s667, 1

</llo_original>
